<compile_context>
chip_gen: v7x
topology: tpu7x:2x2x1
jax: 0.10.0
libtpu: 0.0.40
codegen_flags: <defaults>
</compile_context>

<pallas_src>
import functools

import jax
import jax.numpy as jnp
from jax import lax
from jax.experimental import pallas as pl
from jax.experimental.pallas import tpu as pltpu


# --------------------------------------------------------------------------- #
# Fused kernel: sum over (L, S) blocks -> scale -> MXU matmul -> bias -> store
# --------------------------------------------------------------------------- #
def _image_projection_kernel(hs_ref, w_ref, b_ref, o_ref, acc_ref, *,
                             l_total, l_tile, s_total, s_tile, inv_scale):
    """One grid step of the fused reduction + projection.

    hs_ref : (l_tile, B, s_tile, D)  one (layer-block, patch-block) slab
    w_ref  : (D, H_pad)              projection weight W^T (resident, bf16)
    b_ref  : (1, H_pad)              projection bias (resident, f32)
    o_ref  : (B, H_pad)              projected image embeds (written last step)
    acc_ref: (B, D) f32 VMEM         running raw sum over layers and patches
    """
    l_blk = pl.program_id(0)
    s_blk = pl.program_id(1)
    n_l = pl.num_programs(0)
    n_s = pl.num_programs(1)

    @pl.when(jnp.logical_and(l_blk == 0, s_blk == 0))
    def _init():
        acc_ref[...] = jnp.zeros_like(acc_ref)

    # Number of valid layers in this layer block (the last block may overhang L).
    if l_total % l_tile == 0:
        n_valid_l = l_tile                                   # static trip count
    else:
        n_valid_l = jnp.minimum(l_total - l_blk * l_tile, l_tile)

    def _reduce(fixup):
        # Layer-by-layer accumulate-as-you-reduce: the only live temporary is one
        # (B, s_tile, D) slab; no full-block f32 copy is materialised.
        def body(i, carry):
            slab = fixup(hs_ref[i])                          # (B, s_tile, D)
            acc_ref[...] += jnp.sum(slab, axis=1, dtype=jnp.float32)
            return carry
        lax.fori_loop(0, n_valid_l, body, 0)

    s_rem = s_total % s_tile
    if s_rem == 0:
        # Every patch block is full: no masking on the hot path.
        _reduce(lambda slab: slab)
    else:
        @pl.when(s_blk < n_s - 1)
        def _full_tiles():
            _reduce(lambda slab: slab)

        @pl.when(s_blk == n_s - 1)
        def _ragged_tile():
            # The last patch block overhangs S; its out-of-bounds rows are NOT
            # guaranteed to be zero, so mask them before the sum.
            d = hs_ref.shape[-1]
            mask = lax.broadcasted_iota(jnp.int32, (s_tile, d), 0) < s_rem
            mask3 = mask[None]                               # (1, s_tile, D)
            zero = jnp.zeros((), hs_ref.dtype)
            _reduce(lambda slab: jnp.where(mask3, slab, zero))

    @pl.when(jnp.logical_and(l_blk == n_l - 1, s_blk == n_s - 1))
    def _epilogue():
        # Single O(B*D) scale == mean over layers AND patches (masked/skipped
        # rows contributed 0, and inv_scale uses the true L*S), then one MXU
        # matmul against the resident weight and one lane-dense store.
        image_embeds = acc_ref[...] * inv_scale                       # (B, D) f32
        proj = jnp.dot(image_embeds.astype(w_ref.dtype), w_ref[...],
                       preferred_element_type=jnp.float32)
        o_ref[...] = (proj + b_ref[...]).astype(o_ref.dtype)


# --------------------------------------------------------------------------- #
# VMEM-budget-driven tiling
# --------------------------------------------------------------------------- #
def _chip_vmem_bytes(default=64 << 20):
    """Physical VMEM of the local chip; conservative default if unavailable."""
    try:
        info = pltpu.get_tpu_info()
    except Exception:
        return default
    for name in ("vmem_capacity_bytes", "vmem_size_bytes", "vmem_bytes"):
        val = getattr(info, name, None)
        if val:
            return int(val)
    return default


def _choose_tiles(L, B, S, D, itemsize, tile_budget_bytes):
    """Pick (l_tile, s_tile) so the double-buffered input block plus the
    in-kernel f32 reduction temporaries fit in `tile_budget_bytes`."""
    sub = max(8, 8 * (4 // max(1, itemsize)))        # sublane multiple per dtype

    def fits(s_tile, l_tile):
        # 2 pipeline buffers of the input block + ~2 f32 slabs of temporaries.
        return (2 * l_tile * itemsize + 8) * B * s_tile * D <= tile_budget_bytes

    # Prefer the full patch extent: one fully contiguous DMA per layer block and
    # no ragged-tile masking.  Only tile S when it genuinely does not fit.
    if fits(S, 1):
        s_tile = S
    else:
        s_tile = tile_budget_bytes // ((2 * itemsize + 8) * B * D)
        s_tile = max(sub, (s_tile // sub) * sub)
        if s_tile >= S:
            s_tile = S

    # Grow the layer block as large as the remaining budget allows.
    l_tile = 1
    while l_tile < L and fits(s_tile, l_tile + 1):
        l_tile += 1
    return l_tile, s_tile


def image_projection(hidden_states, weight_t, bias, *, vmem_limit_bytes=None):
    """Fused mean(L) -> mean(S) -> Linear(768, H).

    hidden_states: (L, B, S, D)  stacked ViT hidden states (bf16 or f32)
    weight_t     : (D, H)        projection weight, already transposed (W^T)
    bias         : (1, H)        projection bias
    returns      : (B, H)        f32 projected image embeddings
    """
    L, B, S, D = hidden_states.shape
    D_w, H = weight_t.shape
    assert D_w == D, "weight_t must be (D, H)"

    # Lane-dense output/store path: pad H up to a multiple of 128, slice after.
    H_pad = max(128, ((H + 127) // 128) * 128)
    if H_pad != H:
        weight_t = jnp.pad(weight_t, ((0, 0), (0, H_pad - H)))
        bias = jnp.pad(bias, ((0, 0), (0, H_pad - H)))
    bias = bias.astype(jnp.float32)

    itemsize = jnp.dtype(hidden_states.dtype).itemsize
    w_bytes = D * H_pad * jnp.dtype(weight_t.dtype).itemsize
    b_bytes = H_pad * 4
    acc_bytes = B * D * 4
    out_bytes = B * H_pad * 4

    vmem_cap = _chip_vmem_bytes()
    if vmem_limit_bytes is None:
        # ~48 MiB on v7x (64 MiB physical), 64 MiB on v5e/v6e (128 MiB physical).
        vmem_limit_bytes = min((vmem_cap * 3) // 4, 64 << 20)
    headroom = 2 << 20                                  # Mosaic internal scratch
    # Weight/bias are DMA'd once (constant index map) but still get two pipeline
    # buffers by default -> count both.
    # TODO(synk): pipeline_mode=pl.Buffered(1) on the weight/bias specs would
    # drop the second (unused) buffer; the budget below already accounts for it.
    reserved = 2 * (w_bytes + b_bytes) + acc_bytes + out_bytes + headroom
    tile_budget = max(vmem_limit_bytes - reserved, 1 << 20)
    l_tile, s_tile = _choose_tiles(L, B, S, D, itemsize, tile_budget)
    n_l = pl.cdiv(L, l_tile)
    n_s = pl.cdiv(S, s_tile)

    # Make sure the compiler limit covers what we actually intend to allocate.
    tile_bytes = (2 * l_tile * itemsize + 8) * B * s_tile * D
    vmem_limit_bytes = int(min(max(vmem_limit_bytes, reserved + tile_bytes),
                               (vmem_cap * 9) // 10))

    inv_scale = 1.0 / float(L * S)                      # true (unpadded) L*S

    cost = pl.CostEstimate(
        flops=int(L * B * S * D + 2 * B * D * H_pad),
        transcendentals=0,
        bytes_accessed=int(L * B * S * D * itemsize + w_bytes + b_bytes
                           + out_bytes))

    kernel = functools.partial(
        _image_projection_kernel, l_total=L, l_tile=l_tile,
        s_total=S, s_tile=s_tile, inv_scale=inv_scale)

    out = pl.pallas_call(
        kernel,
        out_shape=jax.ShapeDtypeStruct((B, H_pad), jnp.float32),
        grid_spec=pltpu.PrefetchScalarGridSpec(
            num_scalar_prefetch=0,
            grid=(n_l, n_s),
            in_specs=[
                # One (layer-block, patch-block) slab per step -> double-buffered
                # DMA straight out of the original (unpadded) HBM tensor.
                pl.BlockSpec((l_tile, B, s_tile, D), lambda l, s: (l, 0, s, 0)),
                # Weight & bias: constant block index -> DMA'd once, resident.
                pl.BlockSpec((D, H_pad), lambda l, s: (0, 0)),
                pl.BlockSpec((1, H_pad), lambda l, s: (0, 0)),
            ],
            out_specs=pl.BlockSpec((B, H_pad), lambda l, s: (0, 0)),
            scratch_shapes=[pltpu.VMEM((B, D), jnp.float32)],
        ),
        compiler_params=pltpu.CompilerParams(
            # Both axes carry the accumulator -> sequential.
            # TODO(synk): for v7x dual-TC, a leading "parallel" axis over B tiles
            # (with a per-tile out_spec + epilogue) would use the second core.
            dimension_semantics=("arbitrary", "arbitrary"),
            vmem_limit_bytes=int(vmem_limit_bytes),
        ),
        cost_estimate=cost,
    )(hidden_states, weight_t, bias)

    return out[:, :H]


# --------------------------------------------------------------------------- #
# Glue: adapt_sequence + forward (ViT and LLM are external black boxes)
# --------------------------------------------------------------------------- #
def adapt_sequence(projected_image, token_embeds, attn_mask):
    """Prepend the image embedding to the token embeddings.

    projected_image: (B, 1, H); token_embeds: (B, T, H); attn_mask: (B, T)
    """
    combined = jnp.concatenate(
        [projected_image.astype(token_embeds.dtype), token_embeds], axis=1)
    img_mask = jnp.ones((attn_mask.shape[0], 1), dtype=attn_mask.dtype)
    combined_mask = jnp.concatenate([img_mask, attn_mask], axis=1)
    # TODO(synk): the reference adapt_sequence also rewrites labels/position_ids
    # around the quantized-signal span; that helper is not defined in the module.
    return {"combined_embeds": combined, "attn_mask": combined_mask}


def vit_llm_forward(hidden_states, proj_weight_t, proj_bias,
                    embedding_table, token_ids, attn_mask):
    """Forward-pass semantics of VIT_LLM up to (but excluding) the LLM call."""
    # Steps 2-4 fused in the Pallas kernel (tiled reduction + MXU epilogue).
    projected_image = image_projection(hidden_states, proj_weight_t, proj_bias)
    # get_input_embeddings()(token_ids): plain embedding gather (glue).
    token_embeds = jnp.take(embedding_table, token_ids, axis=0)      # (B, T, H)
    adapted = adapt_sequence(projected_image[:, None, :], token_embeds, attn_mask)
    # TODO(synk): self.llm(inputs_embeds=..., attention_mask=..., labels=...,
    # position_ids=...) is an external transformer and is not re-implemented.
    return projected_image, adapted


# --------------------------------------------------------------------------- #
# Reference + checks
# --------------------------------------------------------------------------- #
def _reference_projection(hidden_states, weight_t, bias):
    hs = hidden_states.astype(jnp.float32)
    img = jnp.mean(jnp.mean(hs, axis=0), axis=1)
    # Match the kernel's epilogue cast (image_embeds -> weight dtype for the dot).
    img = img.astype(weight_t.dtype).astype(jnp.float32)
    w = weight_t.astype(jnp.float32)
    return jnp.dot(img, w, precision=lax.Precision.HIGHEST) + bias.astype(jnp.float32)


def _check_projection(name, projected, hidden_states, weight_t, bias):
    ref = _reference_projection(hidden_states, weight_t, bias)
    assert projected.shape == ref.shape, name
    assert jnp.allclose(projected, ref, atol=5e-3, rtol=5e-3), (
        name, float(jnp.max(jnp.abs(projected - ref))))


if __name__ == "__main__":
    key = jax.random.PRNGKey(0)
    k_hs, k_w, k_b, k_emb, k_tok, k_hs2 = jax.random.split(key, 6)

    # --------------------------------------------------------------- #
    # Test A: tiny end-to-end forward (grid collapses to a single step).
    # --------------------------------------------------------------- #
    L, B, S, D = 5, 2, 8, 768          # layers(+embeds), batch, patches, vit dim
    H = 32                             # llm hidden size
    V, T = 64, 8                       # vocab size, token sequence length

    hidden_states = jax.random.normal(
        k_hs, (L, B, S, D), dtype=jnp.float32).astype(jnp.bfloat16)
    # nn.Linear stores weight as (H, D); the kernel consumes W^T = (D, H) held
    # in bf16 (matching image_projection.to(dtype=self.llm.dtype)).
    proj_weight = jax.random.normal(k_w, (H, D), dtype=jnp.float32) * 0.02
    proj_weight_t = proj_weight.T.astype(jnp.bfloat16)               # (D, H)
    proj_bias = jax.random.normal(k_b, (1, H), dtype=jnp.float32) * 0.02
    embedding_table = jax.random.normal(k_emb, (V, H), dtype=jnp.float32) * 0.02
    token_ids = jax.random.randint(k_tok, (B, T), 0, V, dtype=jnp.int32)
    attn_mask = jnp.ones((B, T), dtype=jnp.int32)

    projected_image, adapted = vit_llm_forward(
        hidden_states, proj_weight_t, proj_bias,
        embedding_table, token_ids, attn_mask)
    jax.block_until_ready(projected_image)
    jax.block_until_ready(adapted["combined_embeds"])

    _check_projection("tiny", projected_image, hidden_states,
                      proj_weight_t, proj_bias)
    assert projected_image.shape == (B, H)
    assert adapted["combined_embeds"].shape == (B, T + 1, H)
    assert adapted["attn_mask"].shape == (B, T + 1)
    assert jnp.allclose(adapted["combined_embeds"][:, 0, :], projected_image,
                        atol=1e-6)

    # --------------------------------------------------------------- #
    # Test B: ViT-base shapes (L=13, S=197) with a small VMEM limit so the
    # patch axis is tiled -> exercises the in-kernel ragged-S mask (there is
    # no wrapper-side jnp.pad of hidden_states anymore).
    # --------------------------------------------------------------- #
    L2, S2 = 13, 197
    hs2 = jax.random.normal(
        k_hs2, (L2, B, S2, D), dtype=jnp.float32).astype(jnp.bfloat16)
    proj_b = image_projection(hs2, proj_weight_t, proj_bias,
                              vmem_limit_bytes=5 << 20)
    jax.block_until_ready(proj_b)
    _check_projection("ragged-S", proj_b, hs2, proj_weight_t, proj_bias)

    # --------------------------------------------------------------- #
    # Test C: same shapes, larger limit -> multiple layers per block
    # (layer blocking) with a ragged last layer block.
    # --------------------------------------------------------------- #
    proj_c = image_projection(hs2, proj_weight_t, proj_bias,
                              vmem_limit_bytes=8 << 20)
    jax.block_until_ready(proj_c)
    _check_projection("blocked-L", proj_c, hs2, proj_weight_t, proj_bias)

    print("KERNEL_OK")
</pallas_src>

<mosaic_0001>
module attributes {stable_mosaic.version = 11 : i64} {
  func.func @_image_projection_kernel(%arg0: i32, %arg1: i32, %arg2: memref<5x2x8x768xbf16, #tpu.memory_space<vmem>>, %arg3: memref<768x128xbf16, #tpu.memory_space<vmem>>, %arg4: memref<1x128xf32, #tpu.memory_space<vmem>>, %arg5: memref<2x128xf32, #tpu.memory_space<vmem>>, %arg6: memref<2x768xf32, #tpu.memory_space<vmem>>) attributes {dimension_semantics = [#tpu.dimension_semantics<arbitrary>, #tpu.dimension_semantics<arbitrary>], iteration_bounds = array<i64: 1, 1>, scalar_prefetch = 0 : i64, scratch_operands = 1 : i64, tpu.core_type = #tpu.core_type<tc>, window_params = [{transform_indices = @transform_0, window_bounds = array<i64: 5, 2, 8, 768>}, {pipeline_mode = #tpu.pipeline_mode<synchronous>, transform_indices = @transform_1, window_bounds = array<i64: 768, 128>}, {pipeline_mode = #tpu.pipeline_mode<synchronous>, transform_indices = @transform_2, window_bounds = array<i64: 1, 128>}, {pipeline_mode = #tpu.pipeline_mode<synchronous>, transform_indices = @transform_3, window_bounds = array<i64: 2, 128>}]} {
    %c0_i32 = arith.constant 0 : i32
    %0 = arith.cmpi eq, %arg0, %c0_i32 : i32
    %c0_i32_0 = arith.constant 0 : i32
    %1 = arith.cmpi eq, %arg1, %c0_i32_0 : i32
    %2 = arith.andi %0, %1 : i1
    %3 = arith.extui %2 : i1 to i32
    %c0_i32_1 = arith.constant 0 : i32
    %4 = arith.cmpi ne, %3, %c0_i32_1 : i32
    scf.if %4 {
      %cst = arith.constant 0.000000e+00 : f32
      %11 = vector.broadcast %cst : f32 to vector<2x768xf32>
      %c0 = arith.constant 0 : index
      %c0_7 = arith.constant 0 : index
      %12 = vector.load %arg6[%c0, %c0_7] : memref<2x768xf32, #tpu.memory_space<vmem>>, vector<2x768xf32>
      tpu.vector_store %arg6[%c0, %c0_7], %11 {strides = array<i32>} : memref<2x768xf32, #tpu.memory_space<vmem>>, vector<2x768xf32>,
    } else {
    }
    %c0_i32_2 = arith.constant 0 : i32
    %c5_i32 = arith.constant 5 : i32
    %5 = arith.addi %c0_i32_2, %c5_i32 : i32
    %c1_i32 = arith.constant 1 : i32
    scf.for %arg7 = %c0_i32_2 to %5 step %c1_i32  : i32 {
      %11 = arith.index_cast %arg7 : i32 to index
      %c0 = arith.constant 0 : index
      %c0_7 = arith.constant 0 : index
      %c0_8 = arith.constant 0 : index
      %12 = vector.load %arg2[%11, %c0, %c0_7, %c0_8] : memref<5x2x8x768xbf16, #tpu.memory_space<vmem>>, vector<1x2x8x768xbf16>
      %13 = vector.shape_cast %12 : vector<1x2x8x768xbf16> to vector<2x8x768xbf16>
      %c0_9 = arith.constant 0 : index
      %c0_10 = arith.constant 0 : index
      %14 = vector.load %arg6[%c0_9, %c0_10] : memref<2x768xf32, #tpu.memory_space<vmem>>, vector<2x768xf32>
      %15 = arith.extf %13 : vector<2x8x768xbf16> to vector<2x8x768xf32>
      %cst = arith.constant dense<0.000000e+00> : vector<2x768xf32>
      %16 = vector.multi_reduction <add>, %15, %cst [1] : vector<2x8x768xf32> to vector<2x768xf32>
      %17 = arith.addf %14, %16 : vector<2x768xf32>
      %c0_11 = arith.constant 0 : index
      %c0_12 = arith.constant 0 : index
      %18 = vector.load %arg6[%c0_11, %c0_12] : memref<2x768xf32, #tpu.memory_space<vmem>>, vector<2x768xf32>
      tpu.vector_store %arg6[%c0_11, %c0_12], %17 {strides = array<i32>} : memref<2x768xf32, #tpu.memory_space<vmem>>, vector<2x768xf32>,
    }
    %c5_i32_3 = arith.constant 5 : i32
    %c0_i32_4 = arith.constant 0 : i32
    %6 = arith.cmpi eq, %arg0, %c0_i32_4 : i32
    %c0_i32_5 = arith.constant 0 : i32
    %7 = arith.cmpi eq, %arg1, %c0_i32_5 : i32
    %8 = arith.andi %6, %7 : i1
    %9 = arith.extui %8 : i1 to i32
    %c0_i32_6 = arith.constant 0 : i32
    %10 = arith.cmpi ne, %9, %c0_i32_6 : i32
    scf.if %10 {
      %c0 = arith.constant 0 : index
      %c0_7 = arith.constant 0 : index
      %11 = vector.load %arg6[%c0, %c0_7] : memref<2x768xf32, #tpu.memory_space<vmem>>, vector<2x768xf32>
      %cst = arith.constant 2.500000e-02 : f32
      %12 = vector.broadcast %cst : f32 to vector<2x768xf32>
      %13 = arith.mulf %11, %12 : vector<2x768xf32>
      %14 = arith.truncf %13 : vector<2x768xf32> to vector<2x768xbf16>
      %c0_8 = arith.constant 0 : index
      %c0_9 = arith.constant 0 : index
      %15 = vector.load %arg3[%c0_8, %c0_9] : memref<768x128xbf16, #tpu.memory_space<vmem>>, vector<768x128xbf16>
      %cst_10 = arith.constant dense<0.000000e+00> : vector<2x128xf32>
      %16 = tpu.matmul %14, %15, %cst_10 {dimension_numbers = #tpu.dot_dimension_numbers<[1], [0], [0], [1], [0, 0, 1, 1], [], []>} : vector<2x768xbf16>, vector<768x128xbf16>, vector<2x128xf32> -> vector<2x128xf32>
      %c0_11 = arith.constant 0 : index
      %c0_12 = arith.constant 0 : index
      %17 = vector.load %arg4[%c0_11, %c0_12] : memref<1x128xf32, #tpu.memory_space<vmem>>, vector<1x128xf32>
      %18 = vector.broadcast %17 : vector<1x128xf32> to vector<2x128xf32>
      %19 = arith.addf %16, %18 : vector<2x128xf32>
      %c0_13 = arith.constant 0 : index
      %c0_14 = arith.constant 0 : index
      %20 = vector.load %arg5[%c0_13, %c0_14] : memref<2x128xf32, #tpu.memory_space<vmem>>, vector<2x128xf32>
      tpu.vector_store %arg5[%c0_13, %c0_14], %19 {strides = array<i32>} : memref<2x128xf32, #tpu.memory_space<vmem>>, vector<2x128xf32>,
    } else {
    }
    return
  }
  func.func @transform_0(%arg0: i32, %arg1: i32) -> (i32, i32, i32, i32) {
    %c0_i32 = arith.constant 0 : i32
    %c0_i32_0 = arith.constant 0 : i32
    %c0_i32_1 = arith.constant 0 : i32
    return %arg0, %c0_i32, %arg1, %c0_i32_0 : i32, i32, i32, i32
  }
  func.func @transform_1(%arg0: i32, %arg1: i32) -> (i32, i32) {
    %c0_i32 = arith.constant 0 : i32
    %c0_i32_0 = arith.constant 0 : i32
    %c0_i32_1 = arith.constant 0 : i32
    return %c0_i32, %c0_i32_0 : i32, i32
  }
  func.func @transform_2(%arg0: i32, %arg1: i32) -> (i32, i32) {
    %c0_i32 = arith.constant 0 : i32
    %c0_i32_0 = arith.constant 0 : i32
    %c0_i32_1 = arith.constant 0 : i32
    return %c0_i32, %c0_i32_0 : i32, i32
  }
  func.func @transform_3(%arg0: i32, %arg1: i32) -> (i32, i32) {
    %c0_i32 = arith.constant 0 : i32
    %c0_i32_0 = arith.constant 0 : i32
    %c0_i32_1 = arith.constant 0 : i32
    return %c0_i32, %c0_i32_0 : i32, i32
  }
}

</mosaic_0001>

<llo_original>
// kernel: tpu_custom_call.1
$region0: #{tpu_custom_call.1}
  #allocation0 [shape = 'u32[]', space=smem, size = 0x4, offset = 0x4, fixed_abs, tag = 'smem constant byte address 0x4 - core index']
  #allocation1 [shape = 'u32[144,128]{1,0:T(1,128)}', space=vmem, size = 0x12000, scoped, tag = 'internal scratch']
  #allocation2 [shape = 'f32[2,768]{1,0:T(2,128)}', space=vmem, size = 0x1800, scoped, tag = 'scratch operand']
  %s0 = inlined_call_operand.hbm [shape: bf16[5,2,8,768], index: 0, kind: input, shape index: {}]
  %s1 = inlined_call_operand.hbm [shape: bf16[768,128], index: 1, kind: input, shape index: {}]
  %s2 = inlined_call_operand.vmem [shape: f32[1,128], index: 2, kind: input, shape index: {}]
  %s3 = inlined_call_operand.hbm [shape: f32[2,128], index: 3, kind: output, shape index: {}]
  %s4 = sld [smem:[#allocation0]]
  $region45: #{tpu_custom_call.1} parent=0
    _
  %s6 = ssub.s32 1, %s4
  %s7 = scalar_select 0, %s6, %s4
  $region1: #{tpu_custom_call.1} parent=0
    #allocation3 [shape = 'u8[122880]{0}', space=vmem, size = 0x1e000, scoped, tag = 'input window, operand 0, single buffered']
    #allocation4 [shape = 's32[1]{0}', space=sflag, size = 0x4, scoped, tag = 'scoped memory for tpu_custom_call.1']
    #allocation5 [shape = 's32[1]{0}', space=sflag, size = 0x4, scoped, tag = 'scoped memory for tpu_custom_call.1']
    #allocation6 [shape = 'u8[196608]{0}', space=vmem, size = 0x30000, scoped, tag = 'input window, operand 1, single buffered']
    #allocation7 [shape = 's32[1]{0}', space=sflag, size = 0x4, scoped, tag = 'scoped memory for tpu_custom_call.1']
    #allocation8 [shape = 'u8[1024]{0}', space=vmem, size = 0x400, scoped, tag = 'output window, operand 0, single buffered']
    %8 = vsyncpa [#allocation4], 0
    %9 = vsyncpa [#allocation7], 0
    %10 = vsyncpa [#allocation5], 0
    // Predicated region
    $region2: #{tpu_custom_call.1} parent=1 // pred_check
      _
    $region3: #{tpu_custom_call.1} parent=1 // pred_check_branch
      %12 = sbr.rel (0) target = $region5
    $region4: #{tpu_custom_call.1} parent=1 // pred_region
      %s14 = ssub.s32 3840, 3840
      %15 = vsyncadd [#allocation4], %s14
      %s16 = sshll.u32 [#allocation3], 4
      %s17 = int_to_ptr.vmem [resolvable:$true] %s16
      %22 = dma.hbm_to_vmem [thread:$0]  %s0, 3840, %s17, [#allocation4], 384, 384, 24
    $region5: #{tpu_custom_call.1} parent=1 // pred_fallthru
      _
    // Predicated region
    $region6: #{tpu_custom_call.1} parent=1 // pred_check
      _
    $region7: #{tpu_custom_call.1} parent=1 // pred_check_branch
      %24 = sbr.rel (0) target = $region9
    $region8: #{tpu_custom_call.1} parent=1 // pred_region
      %s26 = ssub.s32 6144, 6144
      %27 = vsyncadd [#allocation7], %s26
      %s28 = sshll.u32 [#allocation6], 4
      %s29 = int_to_ptr.vmem [resolvable:$true] %s28
      %34 = dma.hbm_to_vmem [thread:$0]  %s1, 6144, %s29, [#allocation7], 64, 64, 4
    $region9: #{tpu_custom_call.1} parent=1 // pred_fallthru
      _
    // Predicated region
    $region10: #{tpu_custom_call.1} parent=1 // pred_check
      _
    $region11: #{tpu_custom_call.1} parent=1 // pred_check_branch
      %36 = sbr.rel (0) target = $region13
    $region12: #{tpu_custom_call.1} parent=1 // pred_region
      _
    $region13: #{tpu_custom_call.1} parent=1 // pred_fallthru
      _
    // Predicated region
    $region14: #{tpu_custom_call.1} parent=1 // pred_check
      _
    $region15: #{tpu_custom_call.1} parent=1 // pred_check_branch
      %38 = sbr.rel (0) target = $region17
    $region16: #{tpu_custom_call.1} parent=1 // pred_region
      %39 = dma.done [#allocation4], 3840
    $region17: #{tpu_custom_call.1} parent=1 // pred_fallthru
      _
    // Predicated region
    $region18: #{tpu_custom_call.1} parent=1 // pred_check
      _
    $region19: #{tpu_custom_call.1} parent=1 // pred_check_branch
      %41 = sbr.rel (0) target = $region21
    $region20: #{tpu_custom_call.1} parent=1 // pred_region
      %42 = dma.done [#allocation7], 6144
    $region21: #{tpu_custom_call.1} parent=1 // pred_fallthru
      _
    %p44 = scmp.eq.s32.totalorder 0, 0
    %p45 = scmp.eq.s32.totalorder 0, 0
    %p46 = pnand %p44, %p45
    %p47 = pneg %p46
    // Predicated region
    $region22: #{tpu_custom_call.1} parent=1 // pred_check
      _
    $region23: #{tpu_custom_call.1} parent=1 // pred_check_branch
      %49 = sbr.rel (%p46) target = $region25
    $region24: #{tpu_custom_call.1} parent=1 // pred_region
      %50 = vst [vmem:[#allocation2] sm:$0xff] 0.0
      %51 = vst [vmem:[#allocation2 + $0x8] sm:$0xf] 0.0
    $region25: #{tpu_custom_call.1} parent=1 // pred_fallthru
      _
    loop: start=0, step=1, limit=5
    $region26: #{tpu_custom_call.1} parent=1 // loop_pre_header
      _
    $region27: #{tpu_custom_call.1} parent=1 // loop_header
      %s53 = sphi 0, %s57
      %p54 = scmp.ge.s32.totalorder %s53, 5
    $region28: #{tpu_custom_call.1} parent=1 // loop_header_branch
      %56 = sbr.rel (%p54) target = $region32
    $region29: #{tpu_custom_call.1} parent=1 // loop_body
      %s58 = smul.u32 %s53, 12
      %s59 = smul.addr %s58, 4
      %s60 = scalar_lea.vmem [#allocation3], %s59
      %v61 = vld [vmem:[%s60] sm:$0xff]
      %v62 = vld [vmem:[%s60 + $0x8] sm:$0xff]
      %v63 = vld [vmem:[%s60 + $0x10] sm:$0xff]
      %v64 = vld [vmem:[%s60 + $0x18] sm:$0xff]
      %v65 = vld [vmem:[%s60 + $0x20] sm:$0xff]
      %v66 = vld [vmem:[%s60 + $0x28] sm:$0xff]
      %v67 = vld [vmem:[#allocation2] sm:$0xff]
      %v68 = vld [vmem:[#allocation2 + $0x8] sm:$0xf]
      %v69 = vunpack.c.l.bf16 %v61
      %v70 = vunpack.c.h.bf16 %v61
      %v71 = vunpack.c.l.bf16 %v62
      %v72 = vunpack.c.h.bf16 %v62
      %v73 = vunpack.c.l.bf16 %v63
      %v74 = vunpack.c.h.bf16 %v63
      %v75 = vunpack.c.l.bf16 %v64
      %v76 = vunpack.c.h.bf16 %v64
      %v77 = vunpack.c.l.bf16 %v65
      %v78 = vunpack.c.h.bf16 %v65
      %v79 = vunpack.c.l.bf16 %v66
      %v80 = vunpack.c.h.bf16 %v66
      %v81 = vrot.slane %v69, 4
      %v82 = vadd.f32 %v69, %v81
      %v83 = vrot.slane %v82, 2
      %v84 = vadd.f32 %v82, %v83
      %v85 = vrot.slane %v84, 1
      %v86 = vadd.f32 %v84, %v85
      %v87 = vrot.slane %v70, 4
      %v88 = vadd.f32 %v70, %v87
      %v89 = vrot.slane %v88, 2
      %v90 = vadd.f32 %v88, %v89
      %v91 = vrot.slane %v90, 1
      %v92 = vadd.f32 %v90, %v91
      %v93 = vrot.slane %v71, 4
      %v94 = vadd.f32 %v71, %v93
      %v95 = vrot.slane %v94, 2
      %v96 = vadd.f32 %v94, %v95
      %v97 = vrot.slane %v96, 1
      %v98 = vadd.f32 %v96, %v97
      %v99 = vrot.slane %v72, 4
      %v100 = vadd.f32 %v72, %v99
      %v101 = vrot.slane %v100, 2
      %v102 = vadd.f32 %v100, %v101
      %v103 = vrot.slane %v102, 1
      %v104 = vadd.f32 %v102, %v103
      %v105 = vrot.slane %v73, 4
      %v106 = vadd.f32 %v73, %v105
      %v107 = vrot.slane %v106, 2
      %v108 = vadd.f32 %v106, %v107
      %v109 = vrot.slane %v108, 1
      %v110 = vadd.f32 %v108, %v109
      %v111 = vrot.slane %v74, 4
      %v112 = vadd.f32 %v74, %v111
      %v113 = vrot.slane %v112, 2
      %v114 = vadd.f32 %v112, %v113
      %v115 = vrot.slane %v114, 1
      %v116 = vadd.f32 %v114, %v115
      %v117 = vrot.slane %v75, 4
      %v118 = vadd.f32 %v75, %v117
      %v119 = vrot.slane %v118, 2
      %v120 = vadd.f32 %v118, %v119
      %v121 = vrot.slane %v120, 1
      %v122 = vadd.f32 %v120, %v121
      %v123 = vrot.slane %v76, 4
      %v124 = vadd.f32 %v76, %v123
      %v125 = vrot.slane %v124, 2
      %v126 = vadd.f32 %v124, %v125
      %v127 = vrot.slane %v126, 1
      %v128 = vadd.f32 %v126, %v127
      %v129 = vrot.slane %v77, 4
      %v130 = vadd.f32 %v77, %v129
      %v131 = vrot.slane %v130, 2
      %v132 = vadd.f32 %v130, %v131
      %v133 = vrot.slane %v132, 1
      %v134 = vadd.f32 %v132, %v133
      %v135 = vrot.slane %v78, 4
      %v136 = vadd.f32 %v78, %v135
      %v137 = vrot.slane %v136, 2
      %v138 = vadd.f32 %v136, %v137
      %v139 = vrot.slane %v138, 1
      %v140 = vadd.f32 %v138, %v139
      %v141 = vrot.slane %v79, 4
      %v142 = vadd.f32 %v79, %v141
      %v143 = vrot.slane %v142, 2
      %v144 = vadd.f32 %v142, %v143
      %v145 = vrot.slane %v144, 1
      %v146 = vadd.f32 %v144, %v145
      %v147 = vrot.slane %v80, 4
      %v148 = vadd.f32 %v80, %v147
      %v149 = vrot.slane %v148, 2
      %v150 = vadd.f32 %v148, %v149
      %v151 = vrot.slane %v150, 1
      %v152 = vadd.f32 %v150, %v151
      %v165 = vcombine.low %v86, %v92
      %v166 = vcombine.low %v98, %v104
      %v168 = vunpack.c.l.s4 1983009808
      %v169 = vunpack.c.0.s8 %v168
      %v170 = vlaneseq
      %v171 = vshrl.u32 %v170, 7
      %v172 = vsub.s32 %v169, %v171
      %v173 = vrot.slane %v165, %v172
      %v175 = vunpack.c.l.s4 1983009808
      %v176 = vunpack.c.0.s8 %v175
      %v177 = vlaneseq
      %v178 = vshrl.u32 %v177, 7
      %v179 = vsub.s32 %v176, %v178
      %v180 = vrot.slane %v166, %v179
      %v181 = vcombine.low %v173, %v180
      %v182 = vcombine.low %v110, %v116
      %v184 = vunpack.c.l.s4 1983009808
      %v185 = vunpack.c.0.s8 %v184
      %v186 = vlaneseq
      %v187 = vshrl.u32 %v186, 7
      %v188 = vsub.s32 %v185, %v187
      %v189 = vrot.slane %v182, %v188
      %v190 = vcombine.low %v122, %v128
      %v191 = vcombine.low %v134, %v140
      %v193 = vunpack.c.l.s4 1983009808
      %v194 = vunpack.c.0.s8 %v193
      %v195 = vlaneseq
      %v196 = vshrl.u32 %v195, 7
      %v197 = vsub.s32 %v194, %v196
      %v198 = vrot.slane %v190, %v197
      %v200 = vunpack.c.l.s4 1983009808
      %v201 = vunpack.c.0.s8 %v200
      %v202 = vlaneseq
      %v203 = vshrl.u32 %v202, 7
      %v204 = vsub.s32 %v201, %v203
      %v205 = vrot.slane %v191, %v204
      %v206 = vcombine.low %v198, %v205
      %v207 = vcombine.low %v146, %v152
      %v209 = vunpack.c.l.s4 1983009808
      %v210 = vunpack.c.0.s8 %v209
      %v211 = vlaneseq
      %v212 = vshrl.u32 %v211, 7
      %v213 = vsub.s32 %v210, %v212
      %v214 = vrot.slane %v207, %v213
      %vm215 = vcmask 1044484
      %v216 = vsel %vm215, %v181, %v181
      %vm217 = vcmask 1046534
      %v218 = vsel %vm217, %v181, %v216
      %v219 = vrot.slane %v206, 7
      %vm220 = vcmask 1041409
      %v221 = vsel %vm220, %v219, %v218
      %vm222 = vcmask 1043459
      %v223 = vsel %vm222, %v219, %v221
      %vm224 = vcmask 1045509
      %v225 = vsel %vm224, %v219, %v223
      %vm226 = vcmask 1047559
      %v227 = vsel %vm226, %v219, %v225
      %v228 = vsel %vm215, %v189, %v189
      %v229 = vsel %vm217, %v189, %v228
      %v230 = vrot.slane %v214, 7
      %v231 = vsel %vm220, %v230, %v229
      %v232 = vsel %vm222, %v230, %v231
      %v233 = vsel %vm224, %v230, %v232
      %v234 = vsel %vm226, %v230, %v233
      %v237 = vadd.f32 %v67, %v227
      %v238 = vadd.f32 %v68, %v234
      %239 = vst [vmem:[#allocation2] sm:$0xff] %v237
      %240 = vst [vmem:[#allocation2 + $0x8] sm:$0xf] %v238
    $region30: #{tpu_custom_call.1} parent=1 // loop_footer
      %s57 = sadd.s32 1, %s53
    $region31: #{tpu_custom_call.1} parent=1 // loop_footer_branch
      %52 = sbr.rel target = $region27
    $region32: #{tpu_custom_call.1} parent=1 // loop_exit
      _
    // Predicated region
    $region33: #{tpu_custom_call.1} parent=1 // pred_check
      _
    $region34: #{tpu_custom_call.1} parent=1 // pred_check_branch
      %242 = sbr.rel (%p46) target = $region36
    $region35: #{tpu_custom_call.1} parent=1 // pred_region
      %v243 = vld [vmem:[#allocation2] sm:$0xff]
      %v244 = vld [vmem:[#allocation2 + $0x8] sm:$0xf]
      %v245 = vmul.f32 %v243, 0.025
      %v246 = vmul.f32 %v244, 0.025
      %v249 = vcombine.high %v245, %v245
      %v251 = vunpack.c.l.s4 1983009808
      %v252 = vunpack.c.0.s8 %v251
      %v253 = vlaneseq
      %v254 = vshrl.u32 %v253, 7
      %v255 = vsub.s32 %v252, %v254
      %v256 = vrot.slane %v245, %v255
      %v258 = vunpack.c.l.s4 1983009808
      %v259 = vunpack.c.0.s8 %v258
      %v260 = vlaneseq
      %v261 = vshrl.u32 %v260, 7
      %v262 = vsub.s32 %v259, %v261
      %v263 = vrot.slane %v249, %v262
      %v264 = vcombine.high %v256, %v256
      %v265 = vcombine.high %v263, %v263
      %v267 = vunpack.c.l.s4 1983009808
      %v268 = vunpack.c.0.s8 %v267
      %v269 = vlaneseq
      %v270 = vshrl.u32 %v269, 7
      %v271 = vsub.s32 %v268, %v270
      %v272 = vrot.slane %v246, %v271
      %v273 = vcombine.high %v272, %v272
      %v280 = vpack.c.bf16 %v256, %v256
      %v281 = vpack.c.bf16 %v264, %v264
      %v282 = vpack.c.bf16 %v263, %v263
      %v283 = vpack.c.bf16 %v265, %v265
      %v284 = vpack.c.bf16 %v272, %v272
      %v285 = vpack.c.bf16 %v273, %v273
      %v286 = vld [vmem:[#allocation6] sm:$0xf]
      %v287 = vld [vmem:[#allocation6 + $0x4] sm:$0xf]
      %v288 = vld [vmem:[#allocation6 + $0x8] sm:$0xf]
      %v289 = vld [vmem:[#allocation6 + $0xc] sm:$0xf]
      %v290 = vld [vmem:[#allocation6 + $0x10] sm:$0xf]
      %v291 = vld [vmem:[#allocation6 + $0x14] sm:$0xf]
      %v292 = vld [vmem:[#allocation6 + $0x18] sm:$0xf]
      %v293 = vld [vmem:[#allocation6 + $0x1c] sm:$0xf]
      %v294 = vld [vmem:[#allocation6 + $0x20] sm:$0xf]
      %v295 = vld [vmem:[#allocation6 + $0x24] sm:$0xf]
      %v296 = vld [vmem:[#allocation6 + $0x28] sm:$0xf]
      %v297 = vld [vmem:[#allocation6 + $0x2c] sm:$0xf]
      %v298 = vld [vmem:[#allocation6 + $0x30] sm:$0xf]
      %v299 = vld [vmem:[#allocation6 + $0x34] sm:$0xf]
      %v300 = vld [vmem:[#allocation6 + $0x38] sm:$0xf]
      %v301 = vld [vmem:[#allocation6 + $0x3c] sm:$0xf]
      %v302 = vld [vmem:[#allocation6 + $0x40] sm:$0xf]
      %v303 = vld [vmem:[#allocation6 + $0x44] sm:$0xf]
      %v304 = vld [vmem:[#allocation6 + $0x48] sm:$0xf]
      %v305 = vld [vmem:[#allocation6 + $0x4c] sm:$0xf]
      %v306 = vld [vmem:[#allocation6 + $0x50] sm:$0xf]
      %v307 = vld [vmem:[#allocation6 + $0x54] sm:$0xf]
      %v308 = vld [vmem:[#allocation6 + $0x58] sm:$0xf]
      %v309 = vld [vmem:[#allocation6 + $0x5c] sm:$0xf]
      %v310 = vld [vmem:[#allocation6 + $0x60] sm:$0xf]
      %v311 = vld [vmem:[#allocation6 + $0x64] sm:$0xf]
      %v312 = vld [vmem:[#allocation6 + $0x68] sm:$0xf]
      %v313 = vld [vmem:[#allocation6 + $0x6c] sm:$0xf]
      %v314 = vld [vmem:[#allocation6 + $0x70] sm:$0xf]
      %v315 = vld [vmem:[#allocation6 + $0x74] sm:$0xf]
      %v316 = vld [vmem:[#allocation6 + $0x78] sm:$0xf]
      %v317 = vld [vmem:[#allocation6 + $0x7c] sm:$0xf]
      %v318 = vld [vmem:[#allocation6 + $0x80] sm:$0xf]
      %v319 = vld [vmem:[#allocation6 + $0x84] sm:$0xf]
      %v320 = vld [vmem:[#allocation6 + $0x88] sm:$0xf]
      %v321 = vld [vmem:[#allocation6 + $0x8c] sm:$0xf]
      %v322 = vld [vmem:[#allocation6 + $0x90] sm:$0xf]
      %v323 = vld [vmem:[#allocation6 + $0x94] sm:$0xf]
      %v324 = vld [vmem:[#allocation6 + $0x98] sm:$0xf]
      %v325 = vld [vmem:[#allocation6 + $0x9c] sm:$0xf]
      %v326 = vld [vmem:[#allocation6 + $0xa0] sm:$0xf]
      %v327 = vld [vmem:[#allocation6 + $0xa4] sm:$0xf]
      %v328 = vld [vmem:[#allocation6 + $0xa8] sm:$0xf]
      %v329 = vld [vmem:[#allocation6 + $0xac] sm:$0xf]
      %v330 = vld [vmem:[#allocation6 + $0xb0] sm:$0xf]
      %v331 = vld [vmem:[#allocation6 + $0xb4] sm:$0xf]
      %v332 = vld [vmem:[#allocation6 + $0xb8] sm:$0xf]
      %v333 = vld [vmem:[#allocation6 + $0xbc] sm:$0xf]
      %v334 = vld [vmem:[#allocation6 + $0xc0] sm:$0xf]
      %v335 = vld [vmem:[#allocation6 + $0xc4] sm:$0xf]
      %v336 = vld [vmem:[#allocation6 + $0xc8] sm:$0xf]
      %v337 = vld [vmem:[#allocation6 + $0xcc] sm:$0xf]
      %v338 = vld [vmem:[#allocation6 + $0xd0] sm:$0xf]
      %v339 = vld [vmem:[#allocation6 + $0xd4] sm:$0xf]
      %v340 = vld [vmem:[#allocation6 + $0xd8] sm:$0xf]
      %v341 = vld [vmem:[#allocation6 + $0xdc] sm:$0xf]
      %v342 = vld [vmem:[#allocation6 + $0xe0] sm:$0xf]
      %v343 = vld [vmem:[#allocation6 + $0xe4] sm:$0xf]
      %v344 = vld [vmem:[#allocation6 + $0xe8] sm:$0xf]
      %v345 = vld [vmem:[#allocation6 + $0xec] sm:$0xf]
      %v346 = vld [vmem:[#allocation6 + $0xf0] sm:$0xf]
      %v347 = vld [vmem:[#allocation6 + $0xf4] sm:$0xf]
      %v348 = vld [vmem:[#allocation6 + $0xf8] sm:$0xf]
      %v349 = vld [vmem:[#allocation6 + $0xfc] sm:$0xf]
      %v350 = vld [vmem:[#allocation6 + $0x100] sm:$0xf]
      %v351 = vld [vmem:[#allocation6 + $0x104] sm:$0xf]
      %v352 = vld [vmem:[#allocation6 + $0x108] sm:$0xf]
      %v353 = vld [vmem:[#allocation6 + $0x10c] sm:$0xf]
      %v354 = vld [vmem:[#allocation6 + $0x110] sm:$0xf]
      %v355 = vld [vmem:[#allocation6 + $0x114] sm:$0xf]
      %v356 = vld [vmem:[#allocation6 + $0x118] sm:$0xf]
      %v357 = vld [vmem:[#allocation6 + $0x11c] sm:$0xf]
      %v358 = vld [vmem:[#allocation6 + $0x120] sm:$0xf]
      %v359 = vld [vmem:[#allocation6 + $0x124] sm:$0xf]
      %v360 = vld [vmem:[#allocation6 + $0x128] sm:$0xf]
      %v361 = vld [vmem:[#allocation6 + $0x12c] sm:$0xf]
      %v362 = vld [vmem:[#allocation6 + $0x130] sm:$0xf]
      %v363 = vld [vmem:[#allocation6 + $0x134] sm:$0xf]
      %v364 = vld [vmem:[#allocation6 + $0x138] sm:$0xf]
      %v365 = vld [vmem:[#allocation6 + $0x13c] sm:$0xf]
      %v366 = vld [vmem:[#allocation6 + $0x140] sm:$0xf]
      %v367 = vld [vmem:[#allocation6 + $0x144] sm:$0xf]
      %v368 = vld [vmem:[#allocation6 + $0x148] sm:$0xf]
      %v369 = vld [vmem:[#allocation6 + $0x14c] sm:$0xf]
      %v370 = vld [vmem:[#allocation6 + $0x150] sm:$0xf]
      %v371 = vld [vmem:[#allocation6 + $0x154] sm:$0xf]
      %v372 = vld [vmem:[#allocation6 + $0x158] sm:$0xf]
      %v373 = vld [vmem:[#allocation6 + $0x15c] sm:$0xf]
      %v374 = vld [vmem:[#allocation6 + $0x160] sm:$0xf]
      %v375 = vld [vmem:[#allocation6 + $0x164] sm:$0xf]
      %v376 = vld [vmem:[#allocation6 + $0x168] sm:$0xf]
      %v377 = vld [vmem:[#allocation6 + $0x16c] sm:$0xf]
      %v378 = vld [vmem:[#allocation6 + $0x170] sm:$0xf]
      %v379 = vld [vmem:[#allocation6 + $0x174] sm:$0xf]
      %v380 = vld [vmem:[#allocation6 + $0x178] sm:$0xf]
      %v381 = vld [vmem:[#allocation6 + $0x17c] sm:$0xf]
      %v382 = vld [vmem:[%s2] sm:$0x1]
      %v384 = vlaneseq
      %v385 = vshrl.u32 %v384, 7
      %v386 = vsub.s32 0, %v385
      %v387 = vrot.slane %v382, %v386
      %v485 = vunpack.c.l.b16 %v286
      %v486 = vunpack.c.l.b16 %v287
      %v487 = vunpack.c.l.b16 %v288
      %v488 = vunpack.c.l.b16 %v289
      %v489 = vunpack.c.l.b16 %v290
      %v490 = vunpack.c.l.b16 %v291
      %v491 = vunpack.c.l.b16 %v292
      %v492 = vunpack.c.l.b16 %v293
      %v493 = vunpack.c.l.b16 %v294
      %v494 = vunpack.c.l.b16 %v295
      %v495 = vunpack.c.l.b16 %v296
      %v496 = vunpack.c.l.b16 %v297
      %v497 = vunpack.c.l.b16 %v298
      %v498 = vunpack.c.l.b16 %v299
      %v499 = vunpack.c.l.b16 %v300
      %v500 = vunpack.c.l.b16 %v301
      %v501 = vunpack.c.l.b16 %v302
      %v502 = vunpack.c.l.b16 %v303
      %v503 = vunpack.c.l.b16 %v304
      %v504 = vunpack.c.l.b16 %v305
      %v505 = vunpack.c.l.b16 %v306
      %v506 = vunpack.c.l.b16 %v307
      %v507 = vunpack.c.l.b16 %v308
      %v508 = vunpack.c.l.b16 %v309
      %v509 = vunpack.c.l.b16 %v310
      %v510 = vunpack.c.l.b16 %v311
      %v511 = vunpack.c.l.b16 %v312
      %v512 = vunpack.c.l.b16 %v313
      %v513 = vunpack.c.l.b16 %v314
      %v514 = vunpack.c.l.b16 %v315
      %v515 = vunpack.c.l.b16 %v316
      %v516 = vunpack.c.l.b16 %v317
      %v517 = vunpack.c.l.b16 %v318
      %v518 = vunpack.c.l.b16 %v319
      %v519 = vunpack.c.l.b16 %v320
      %v520 = vunpack.c.l.b16 %v321
      %v521 = vunpack.c.l.b16 %v322
      %v522 = vunpack.c.l.b16 %v323
      %v523 = vunpack.c.l.b16 %v324
      %v524 = vunpack.c.l.b16 %v325
      %v525 = vunpack.c.l.b16 %v326
      %v526 = vunpack.c.l.b16 %v327
      %v527 = vunpack.c.l.b16 %v328
      %v528 = vunpack.c.l.b16 %v329
      %v529 = vunpack.c.l.b16 %v330
      %v530 = vunpack.c.l.b16 %v331
      %v531 = vunpack.c.l.b16 %v332
      %v532 = vunpack.c.l.b16 %v333
      %v533 = vunpack.c.l.b16 %v334
      %v534 = vunpack.c.l.b16 %v335
      %v535 = vunpack.c.l.b16 %v336
      %v536 = vunpack.c.l.b16 %v337
      %v537 = vunpack.c.l.b16 %v338
      %v538 = vunpack.c.l.b16 %v339
      %v539 = vunpack.c.l.b16 %v340
      %v540 = vunpack.c.l.b16 %v341
      %v541 = vunpack.c.l.b16 %v342
      %v542 = vunpack.c.l.b16 %v343
      %v543 = vunpack.c.l.b16 %v344
      %v544 = vunpack.c.l.b16 %v345
      %v545 = vunpack.c.l.b16 %v346
      %v546 = vunpack.c.l.b16 %v347
      %v547 = vunpack.c.l.b16 %v348
      %v548 = vunpack.c.l.b16 %v349
      %v549 = vunpack.c.l.b16 %v350
      %v550 = vunpack.c.l.b16 %v351
      %v551 = vunpack.c.l.b16 %v352
      %v552 = vunpack.c.l.b16 %v353
      %v553 = vunpack.c.l.b16 %v354
      %v554 = vunpack.c.l.b16 %v355
      %v555 = vunpack.c.l.b16 %v356
      %v556 = vunpack.c.l.b16 %v357
      %v557 = vunpack.c.l.b16 %v358
      %v558 = vunpack.c.l.b16 %v359
      %v559 = vunpack.c.l.b16 %v360
      %v560 = vunpack.c.l.b16 %v361
      %v561 = vunpack.c.l.b16 %v362
      %v562 = vunpack.c.l.b16 %v363
      %v563 = vunpack.c.l.b16 %v364
      %v564 = vunpack.c.l.b16 %v365
      %v565 = vunpack.c.l.b16 %v366
      %v566 = vunpack.c.l.b16 %v367
      %v567 = vunpack.c.l.b16 %v368
      %v568 = vunpack.c.l.b16 %v369
      %v569 = vunpack.c.l.b16 %v370
      %v570 = vunpack.c.l.b16 %v371
      %v571 = vunpack.c.l.b16 %v372
      %v572 = vunpack.c.l.b16 %v373
      %v573 = vunpack.c.l.b16 %v374
      %v574 = vunpack.c.l.b16 %v375
      %v575 = vunpack.c.l.b16 %v376
      %v576 = vunpack.c.l.b16 %v377
      %v577 = vunpack.c.l.b16 %v378
      %v578 = vunpack.c.l.b16 %v379
      %v579 = vunpack.c.l.b16 %v380
      %v580 = vunpack.c.l.b16 %v381
      %v581 = vpack.c.b16 %v486, %v485
      %v582 = vpack.c.b16 %v488, %v487
      %v583 = vpack.c.b16 %v490, %v489
      %v584 = vpack.c.b16 %v492, %v491
      %v585 = vpack.c.b16 %v494, %v493
      %v586 = vpack.c.b16 %v496, %v495
      %v587 = vpack.c.b16 %v498, %v497
      %v588 = vpack.c.b16 %v500, %v499
      %v589 = vpack.c.b16 %v502, %v501
      %v590 = vpack.c.b16 %v504, %v503
      %v591 = vpack.c.b16 %v506, %v505
      %v592 = vpack.c.b16 %v508, %v507
      %v593 = vpack.c.b16 %v510, %v509
      %v594 = vpack.c.b16 %v512, %v511
      %v595 = vpack.c.b16 %v514, %v513
      %v596 = vpack.c.b16 %v516, %v515
      %v597 = vpack.c.b16 %v518, %v517
      %v598 = vpack.c.b16 %v520, %v519
      %v599 = vpack.c.b16 %v522, %v521
      %v600 = vpack.c.b16 %v524, %v523
      %v601 = vpack.c.b16 %v526, %v525
      %v602 = vpack.c.b16 %v528, %v527
      %v603 = vpack.c.b16 %v530, %v529
      %v604 = vpack.c.b16 %v532, %v531
      %v605 = vpack.c.b16 %v534, %v533
      %v606 = vpack.c.b16 %v536, %v535
      %v607 = vpack.c.b16 %v538, %v537
      %v608 = vpack.c.b16 %v540, %v539
      %v609 = vpack.c.b16 %v542, %v541
      %v610 = vpack.c.b16 %v544, %v543
      %v611 = vpack.c.b16 %v546, %v545
      %v612 = vpack.c.b16 %v548, %v547
      %v613 = vpack.c.b16 %v550, %v549
      %v614 = vpack.c.b16 %v552, %v551
      %v615 = vpack.c.b16 %v554, %v553
      %v616 = vpack.c.b16 %v556, %v555
      %v617 = vpack.c.b16 %v558, %v557
      %v618 = vpack.c.b16 %v560, %v559
      %v619 = vpack.c.b16 %v562, %v561
      %v620 = vpack.c.b16 %v564, %v563
      %v621 = vpack.c.b16 %v566, %v565
      %v622 = vpack.c.b16 %v568, %v567
      %v623 = vpack.c.b16 %v570, %v569
      %v624 = vpack.c.b16 %v572, %v571
      %v625 = vpack.c.b16 %v574, %v573
      %v626 = vpack.c.b16 %v576, %v575
      %v627 = vpack.c.b16 %v578, %v577
      %v628 = vpack.c.b16 %v580, %v579
      %677 = vmatprep.subr.bf16.mxu0 0
      %678 = vmatpush1.bf16.msra.mxu0 %v581
      %679 = vmatprep.subr.bf16.mxu0 0
      %680 = vmatpush1.bf16.msra.mxu0 %v582
      %681 = vmatprep.subr.bf16.mxu0 0
      %682 = vmatpush1.bf16.msra.mxu0 %v583
      %683 = vmatprep.subr.bf16.mxu0 0
      %684 = vmatpush1.bf16.msra.mxu0 %v584
      %685 = vmatprep.subr.bf16.mxu0 0
      %686 = vmatpush1.bf16.msra.mxu0 %v585
      %687 = vmatprep.subr.bf16.mxu0 0
      %688 = vmatpush1.bf16.msra.mxu0 %v586
      %689 = vmatprep.subr.bf16.mxu0 0
      %690 = vmatpush1.bf16.msra.mxu0 %v587
      %691 = vmatprep.subr.bf16.mxu0 0
      %692 = vmatpush1.bf16.msra.mxu0 %v588
      %693 = vmatprep.subr.bf16.mxu0 0
      %694 = vmatpush1.bf16.msra.mxu0 %v589
      %695 = vmatprep.subr.bf16.mxu0 0
      %696 = vmatpush1.bf16.msra.mxu0 %v590
      %697 = vmatprep.subr.bf16.mxu0 0
      %698 = vmatpush1.bf16.msra.mxu0 %v591
      %699 = vmatprep.subr.bf16.mxu0 0
      %700 = vmatpush1.bf16.msra.mxu0 %v592
      %701 = vmatprep.subr.bf16.mxu0 0
      %702 = vmatpush1.bf16.msra.mxu0 %v593
      %703 = vmatprep.subr.bf16.mxu0 0
      %704 = vmatpush1.bf16.msra.mxu0 %v594
      %705 = vmatprep.subr.bf16.mxu0 0
      %706 = vmatpush1.bf16.msra.mxu0 %v595
      %707 = vmatprep.subr.bf16.mxu0 0
      %708 = vmatpush1.bf16.msra.mxu0 %v596
      %709 = vmatprep.mubr.bf16.mxu0 %v281
      %710 = vmatmul.mubr.bf16.gmra.mrb[0].mxu0 %v280
      %v711 = vpop.f32.mrb[0].mxu0
      %v712 = vadd.f32 %v387, %v711
      %v713 = vpop.f32.mrb[0].mxu0
      %v714 = vpop.f32.mrb[0].mxu0
      %v715 = vpop.f32.mrb[0].mxu0
      %716 = vdwg.mxu0
      %717 = vmatprep.subr.bf16.mxu0 0
      %718 = vmatpush1.bf16.msra.mxu0 %v597
      %719 = vmatprep.subr.bf16.mxu0 0
      %720 = vmatpush1.bf16.msra.mxu0 %v598
      %721 = vmatprep.subr.bf16.mxu0 0
      %722 = vmatpush1.bf16.msra.mxu0 %v599
      %723 = vmatprep.subr.bf16.mxu0 0
      %724 = vmatpush1.bf16.msra.mxu0 %v600
      %725 = vmatprep.subr.bf16.mxu0 0
      %726 = vmatpush1.bf16.msra.mxu0 %v601
      %727 = vmatprep.subr.bf16.mxu0 0
      %728 = vmatpush1.bf16.msra.mxu0 %v602
      %729 = vmatprep.subr.bf16.mxu0 0
      %730 = vmatpush1.bf16.msra.mxu0 %v603
      %731 = vmatprep.subr.bf16.mxu0 0
      %732 = vmatpush1.bf16.msra.mxu0 %v604
      %733 = vmatprep.subr.bf16.mxu0 0
      %734 = vmatpush1.bf16.msra.mxu0 %v605
      %735 = vmatprep.subr.bf16.mxu0 0
      %736 = vmatpush1.bf16.msra.mxu0 %v606
      %737 = vmatprep.subr.bf16.mxu0 0
      %738 = vmatpush1.bf16.msra.mxu0 %v607
      %739 = vmatprep.subr.bf16.mxu0 0
      %740 = vmatpush1.bf16.msra.mxu0 %v608
      %741 = vmatprep.subr.bf16.mxu0 0
      %742 = vmatpush1.bf16.msra.mxu0 %v609
      %743 = vmatprep.subr.bf16.mxu0 0
      %744 = vmatpush1.bf16.msra.mxu0 %v610
      %745 = vmatprep.subr.bf16.mxu0 0
      %746 = vmatpush1.bf16.msra.mxu0 %v611
      %747 = vmatprep.subr.bf16.mxu0 0
      %748 = vmatpush1.bf16.msra.mxu0 %v612
      %749 = vmatprep.mubr.bf16.mxu0 %v283
      %750 = vmatmul.mubr.bf16.gmra.mrb[0].mxu0 %v282
      %v751 = vpop.f32.mrb[0].mxu0
      %v752 = vadd.f32 %v712, %v751
      %v753 = vpop.f32.mrb[0].mxu0
      %v754 = vpop.f32.mrb[0].mxu0
      %v755 = vpop.f32.mrb[0].mxu0
      %756 = vdwg.mxu0
      %757 = vmatprep.subr.bf16.mxu0 0
      %758 = vmatpush1.bf16.msra.mxu0 %v613
      %759 = vmatprep.subr.bf16.mxu0 0
      %760 = vmatpush1.bf16.msra.mxu0 %v614
      %761 = vmatprep.subr.bf16.mxu0 0
      %762 = vmatpush1.bf16.msra.mxu0 %v615
      %763 = vmatprep.subr.bf16.mxu0 0
      %764 = vmatpush1.bf16.msra.mxu0 %v616
      %765 = vmatprep.subr.bf16.mxu0 0
      %766 = vmatpush1.bf16.msra.mxu0 %v617
      %767 = vmatprep.subr.bf16.mxu0 0
      %768 = vmatpush1.bf16.msra.mxu0 %v618
      %769 = vmatprep.subr.bf16.mxu0 0
      %770 = vmatpush1.bf16.msra.mxu0 %v619
      %771 = vmatprep.subr.bf16.mxu0 0
      %772 = vmatpush1.bf16.msra.mxu0 %v620
      %773 = vmatprep.subr.bf16.mxu0 0
      %774 = vmatpush1.bf16.msra.mxu0 %v621
      %775 = vmatprep.subr.bf16.mxu0 0
      %776 = vmatpush1.bf16.msra.mxu0 %v622
      %777 = vmatprep.subr.bf16.mxu0 0
      %778 = vmatpush1.bf16.msra.mxu0 %v623
      %779 = vmatprep.subr.bf16.mxu0 0
      %780 = vmatpush1.bf16.msra.mxu0 %v624
      %781 = vmatprep.subr.bf16.mxu0 0
      %782 = vmatpush1.bf16.msra.mxu0 %v625
      %783 = vmatprep.subr.bf16.mxu0 0
      %784 = vmatpush1.bf16.msra.mxu0 %v626
      %785 = vmatprep.subr.bf16.mxu0 0
      %786 = vmatpush1.bf16.msra.mxu0 %v627
      %787 = vmatprep.subr.bf16.mxu0 0
      %788 = vmatpush1.bf16.msra.mxu0 %v628
      %789 = vmatprep.mubr.bf16.mxu0 %v285
      %790 = vmatmul.mubr.bf16.gmra.mrb[0].mxu0 %v284
      %v791 = vpop.f32.mrb[0].mxu0
      %v792 = vadd.f32 %v752, %v791
      %v793 = vpop.f32.mrb[0].mxu0
      %v794 = vpop.f32.mrb[0].mxu0
      %v795 = vpop.f32.mrb[0].mxu0
      %796 = vdwg.mxu0
      %797 = vst [vmem:[#allocation8] sm:$0x3] %v792
    $region36: #{tpu_custom_call.1} parent=1 // pred_fallthru
      _
    // Predicated region
    $region37: #{tpu_custom_call.1} parent=1 // pred_check
      _
    $region38: #{tpu_custom_call.1} parent=1 // pred_check_branch
      %799 = sbr.rel (0) target = $region40
    $region39: #{tpu_custom_call.1} parent=1 // pred_region
      %s801 = ssub.s32 32, 32
      %802 = vsyncadd [#allocation5], %s801
      %s804 = sshll.u32 [#allocation8], 4
      %s805 = int_to_ptr.vmem [resolvable:$true] %s804
      %807 = dma.vmem_to_hbm [thread:$0]  %s805, 32, %s3, [#allocation5]
    $region40: #{tpu_custom_call.1} parent=1 // pred_fallthru
      _
    // Predicated region
    $region41: #{tpu_custom_call.1} parent=1 // pred_check
      _
    $region42: #{tpu_custom_call.1} parent=1 // pred_check_branch
      %809 = sbr.rel (0) target = $region44
    $region43: #{tpu_custom_call.1} parent=1 // pred_region
      %810 = dma.done [#allocation5], 32
    $region44: #{tpu_custom_call.1} parent=1 // pred_fallthru
      _
    %811 = vsyncpa [#allocation4], 1
    %812 = vsyncpa [#allocation7], 1
    %813 = vsyncpa [#allocation5], 1

</llo_original>
